<compile_context>
chip_gen: v5e
topology: v5e:2x2
jax: 0.10.0
libtpu: 0.0.40
codegen_flags: <defaults>
</compile_context>

<pallas_src>
import functools
import math

import jax
import jax.numpy as jnp
from jax import lax
from jax.experimental import pallas as pl
from jax.experimental.pallas import tpu as pltpu


def _conv1d_same_kernel(xl_ref, xc_ref, xr_ref, w_ref, b_ref, o_ref, win_ref, *,
                        ksize, pad_left, length, compute_dtype):
    """One (batch, L-tile) grid step.

    xl_ref : (1, C_in, HALO)    block just left of this tile (halo source)
    xc_ref : (1, C_in, TILE_L)  this tile's columns
    xr_ref : (1, C_in, HALO)    block just right of this tile (halo source)
    w_ref  : (K, C_out, C_in)   per-tap weight matrices (grid-invariant)
    b_ref  : (C_out, 1)         bias (grid-invariant)
    o_ref  : (1, C_out, TILE_L) lane-dense output tile (NCL layout)
    win_ref: (C_in, TILE_L+K-1) VMEM scratch for the haloed window
    """
    lt = pl.program_id(1)
    c_out, tile_l = o_ref.shape[1], o_ref.shape[2]
    halo_w = xl_ref.shape[2]
    pad_right = ksize - 1 - pad_left

    # Assemble the haloed window in VMEM scratch so that
    #   win_ref[:, j] == x[:, lt*TILE_L - pad_left + j]   (edges fixed by mask)
    if pad_left > 0:
        win_ref[:, :pad_left] = xl_ref[0, :, halo_w - pad_left:]
    win_ref[:, pad_left:pad_left + tile_l] = xc_ref[0]
    if pad_right > 0:
        win_ref[:, pad_left + tile_l:] = xr_ref[0, :, :pad_right]

    # In-kernel 'same' padding: zero every window column whose global index
    # falls outside [0, length). This also neutralizes clamped halo blocks at
    # the array edges and any garbage from partial blocks.
    col = (lax.broadcasted_iota(jnp.int32, win_ref.shape, 1)
           + lt * tile_l - pad_left)
    win = jnp.where((col >= 0) & (col < length),
                    win_ref[...], 0).astype(compute_dtype)

    # Bias-initialized f32 accumulator (broadcast hoisted out of the K loop),
    # then K small MXU matmuls with a lane-dense (C_out, TILE_L) result.
    acc = jnp.broadcast_to(b_ref[...].astype(jnp.float32), (c_out, tile_l))
    for k in range(ksize):  # K is small & static -> unrolled
        acc = acc + jnp.dot(w_ref[k].astype(compute_dtype),
                            win[:, k:k + tile_l],
                            preferred_element_type=jnp.float32)
    o_ref[0] = acc.astype(o_ref.dtype)


def _choose_tile_l(l_out, c_in, c_out, itemsize):
    """Largest 128-multiple L tile fitting a conservative per-step VMEM budget."""
    budget = 8 * 1024 * 1024  # double-buffered in+out tiles << 32 MiB scoped VMEM
    per_col = 2 * (c_in + c_out) * max(itemsize, 4)
    t = budget // max(per_col, 1)
    t = max(128, min(2048, (t // 128) * 128))
    t = min(t, ((l_out + 127) // 128) * 128)  # no wider than the problem
    return int(t)


def conv1d_same_padding_pallas(x_ncl, weight_oik, bias_o,
                               stride=1, dilation=1, groups=1, *,
                               compute_dtype=jnp.bfloat16, tile_l=None):
    """Replicates conv1d_same_padding(input, weight, bias, ...) for the module
    defaults, entirely in the PyTorch NCL layout.

    x_ncl:      (N, C_in, L)      float32
    weight_oik: (C_out, C_in, K)  float32
    bias_o:     (C_out,)          float32
    Returns (N, C_out, L) matching F.conv1d with the module's 'same' padding.
    """
    # TODO(synk): only stride=1, dilation=1, groups=1 (the module defaults) are
    # implemented in the Pallas hot path.
    assert stride == 1 and dilation == 1 and groups == 1

    n, c_in, length = x_ncl.shape
    c_out, _, ksize = weight_oik.shape
    assert 1 <= ksize <= 128

    # --- exact 'same' padding math from conv1d_same_padding (stride=dil=1) ---
    padding_rows = max(0, ksize - 1)
    rows_odd = padding_rows % 2
    pad_left = padding_rows // 2
    pad_right = padding_rows - pad_left          # == pad_left + rows_odd
    l_out = length                               # stride-1 'same' conv

    # --- L tile selection (bounded VMEM, lane-dense multiples of 128) ---
    if tile_l is None:
        tile_l = _choose_tile_l(l_out, c_in, c_out, x_ncl.dtype.itemsize)
    if l_out <= 128:
        tile_l = l_out                           # single full-width tile
    assert tile_l == l_out or tile_l % 128 == 0
    halo_w = min(128, tile_l)
    assert pad_left <= halo_w and pad_right <= halo_w
    num_tiles = (l_out + tile_l - 1) // tile_l
    tpb = tile_l // halo_w                       # halo blocks per L tile
    n_halo_blocks = (length + halo_w - 1) // halo_w

    # Small parameters reshaped/cast once in the wrapper (negligible traffic).
    w_koc = jnp.transpose(weight_oik, (2, 0, 1)).astype(compute_dtype)  # (K, C_out, C_in)
    b_2d = bias_o.reshape(c_out, 1).astype(jnp.float32)

    kernel = functools.partial(_conv1d_same_kernel, ksize=ksize,
                               pad_left=pad_left, length=length,
                               compute_dtype=compute_dtype)

    out = pl.pallas_call(
        kernel,
        out_shape=jax.ShapeDtypeStruct((n, c_out, l_out), x_ncl.dtype),
        grid=(n, num_tiles),
        in_specs=[
            # left halo: the halo_w-wide block just left of this tile (clamped at 0)
            pl.BlockSpec((1, c_in, halo_w),
                         lambda b, lt: (b, 0, jnp.maximum(lt * tpb - 1, 0))),
            # current tile
            pl.BlockSpec((1, c_in, tile_l), lambda b, lt: (b, 0, lt)),
            # right halo: the halo_w-wide block just right of this tile (clamped)
            pl.BlockSpec((1, c_in, halo_w),
                         lambda b, lt: (b, 0, jnp.minimum((lt + 1) * tpb,
                                                          n_halo_blocks - 1))),
            # weights / bias: grid-invariant blocks -> fetched once, stay resident
            pl.BlockSpec((ksize, c_out, c_in), lambda b, lt: (0, 0, 0)),
            pl.BlockSpec((c_out, 1), lambda b, lt: (0, 0)),
        ],
        out_specs=pl.BlockSpec((1, c_out, tile_l), lambda b, lt: (b, 0, lt)),
        scratch_shapes=[pltpu.VMEM((c_in, tile_l + ksize - 1), x_ncl.dtype)],
        compiler_params=pltpu.CompilerParams(
            dimension_semantics=("parallel", "parallel"),
            vmem_limit_bytes=32 * 1024 * 1024,
        ),
    )(x_ncl, x_ncl, x_ncl, w_koc, b_2d)
    return out


def _reference_conv(x_ncl, weight_oik, bias_o):
    """Pure-JAX f32 reference of the same 'same'-padding conv (stride=dil=1)."""
    n, c_in, length = x_ncl.shape
    c_out, _, ksize = weight_oik.shape
    padding_rows = max(0, ksize - 1)
    rows_odd = padding_rows % 2
    pad_sym = padding_rows // 2
    x = jnp.pad(x_ncl, ((0, 0), (0, 0), (pad_sym, pad_sym + rows_odd)))
    l_out = x.shape[2] - ksize + 1
    acc = jnp.zeros((n, c_out, l_out), jnp.float32)
    for k in range(ksize):
        acc = acc + jnp.einsum('ncl,oc->nol', x[:, :, k:k + l_out],
                               weight_oik[:, :, k],
                               precision=jax.lax.Precision.HIGHEST)
    return acc + bias_o[None, :, None]


if __name__ == "__main__":
    key = jax.random.PRNGKey(0)

    def make_case(k, n, c_in, c_out, ksize, length):
        # mirrors _ConvNd.reset_parameters: uniform(-stdv, stdv)
        stdv = 1.0 / math.sqrt(c_in * ksize)
        k_w, k_b, k_x = jax.random.split(k, 3)
        w = jax.random.uniform(k_w, (c_out, c_in, ksize), jnp.float32, -stdv, stdv)
        b = jax.random.uniform(k_b, (c_out,), jnp.float32, -stdv, stdv)
        x = jax.random.normal(k_x, (n, c_in, length), jnp.float32)
        return x, w, b

    k1, k2, k3 = jax.random.split(key, 3)

    # 1) module-default demo shapes (batch=2, C_in=4, C_out=8, L=16), f32 path
    x, w, b = make_case(k1, 2, 4, 8, 3, 16)
    out = jax.block_until_ready(
        conv1d_same_padding_pallas(x, w, b, compute_dtype=jnp.float32))
    ref = _reference_conv(x, w, b)
    assert out.shape == (2, 8, 16), out.shape
    assert jnp.allclose(out, ref, atol=1e-4, rtol=1e-4), "case 1 mismatch"

    # 2) L-tiled path (grid=(2, 4), halo blocks exercised), bf16 MXU operands
    x, w, b = make_case(k2, 2, 8, 16, 3, 1024)
    out = jax.block_until_ready(
        conv1d_same_padding_pallas(x, w, b, tile_l=256))
    bf = lambda a: a.astype(jnp.bfloat16).astype(jnp.float32)
    ref = _reference_conv(bf(x), bf(w), b)
    assert out.shape == (2, 16, 1024), out.shape
    assert jnp.allclose(out, ref, atol=1e-4, rtol=1e-4), "case 2 mismatch"

    # 3) even kernel size (asymmetric 'same' padding), f32 path, tiled grid
    x, w, b = make_case(k3, 2, 8, 16, 4, 1024)
    out = jax.block_until_ready(
        conv1d_same_padding_pallas(x, w, b, tile_l=256,
                                   compute_dtype=jnp.float32))
    ref = _reference_conv(x, w, b)
    assert out.shape == (2, 16, 1024), out.shape
    assert jnp.allclose(out, ref, atol=1e-4, rtol=1e-4), "case 3 mismatch"

    print("KERNEL_OK")
</pallas_src>

<mosaic_0001>
module attributes {stable_mosaic.version = 11 : i64} {
  func.func @_conv1d_same_kernel(%arg0: i32, %arg1: i32, %arg2: memref<1x4x16xf32, #tpu.memory_space<vmem>>, %arg3: memref<1x4x16xf32, #tpu.memory_space<vmem>>, %arg4: memref<1x4x16xf32, #tpu.memory_space<vmem>>, %arg5: memref<3x8x4xf32, #tpu.memory_space<vmem>>, %arg6: memref<8x1xf32, #tpu.memory_space<vmem>>, %arg7: memref<1x8x16xf32, #tpu.memory_space<vmem>>, %arg8: memref<4x18xf32, #tpu.memory_space<vmem>>) attributes {dimension_semantics = [#tpu.dimension_semantics<parallel>, #tpu.dimension_semantics<parallel>], iteration_bounds = array<i64: 2, 1>, scalar_prefetch = 0 : i64, scratch_operands = 1 : i64, tpu.core_type = #tpu.core_type<tc>, window_params = [{transform_indices = @transform_0, window_bounds = array<i64: 1, 4, 16>}, {transform_indices = @transform_1, window_bounds = array<i64: 1, 4, 16>}, {transform_indices = @transform_2, window_bounds = array<i64: 1, 4, 16>}, {pipeline_mode = #tpu.pipeline_mode<synchronous>, transform_indices = @transform_3, window_bounds = array<i64: 3, 8, 4>}, {pipeline_mode = #tpu.pipeline_mode<synchronous>, transform_indices = @transform_4, window_bounds = array<i64: 8, 1>}, {transform_indices = @transform_5, window_bounds = array<i64: 1, 8, 16>}]} {
    %c0 = arith.constant 0 : index
    %c0_0 = arith.constant 0 : index
    %c15 = arith.constant 15 : index
    %0 = vector.load %arg2[%c0, %c0_0, %c15] : memref<1x4x16xf32, #tpu.memory_space<vmem>>, vector<1x4x1xf32>
    %1 = vector.shape_cast %0 : vector<1x4x1xf32> to vector<4x1xf32>
    %c0_1 = arith.constant 0 : index
    %c0_2 = arith.constant 0 : index
    %2 = vector.load %arg8[%c0_1, %c0_2] : memref<4x18xf32, #tpu.memory_space<vmem>>, vector<4x1xf32>
    tpu.vector_store %arg8[%c0_1, %c0_2], %1 {strides = array<i32>} : memref<4x18xf32, #tpu.memory_space<vmem>>, vector<4x1xf32>,
    %c0_3 = arith.constant 0 : index
    %c0_4 = arith.constant 0 : index
    %c0_5 = arith.constant 0 : index
    %3 = vector.load %arg3[%c0_3, %c0_4, %c0_5] : memref<1x4x16xf32, #tpu.memory_space<vmem>>, vector<1x4x16xf32>
    %4 = vector.shape_cast %3 : vector<1x4x16xf32> to vector<4x16xf32>
    %c0_6 = arith.constant 0 : index
    %c1 = arith.constant 1 : index
    %5 = vector.load %arg8[%c0_6, %c1] : memref<4x18xf32, #tpu.memory_space<vmem>>, vector<4x16xf32>
    tpu.vector_store %arg8[%c0_6, %c1], %4 {strides = array<i32>} : memref<4x18xf32, #tpu.memory_space<vmem>>, vector<4x16xf32>,
    %c0_7 = arith.constant 0 : index
    %c0_8 = arith.constant 0 : index
    %c0_9 = arith.constant 0 : index
    %6 = vector.load %arg4[%c0_7, %c0_8, %c0_9] : memref<1x4x16xf32, #tpu.memory_space<vmem>>, vector<1x4x1xf32>
    %7 = vector.shape_cast %6 : vector<1x4x1xf32> to vector<4x1xf32>
    %c0_10 = arith.constant 0 : index
    %c17 = arith.constant 17 : index
    %8 = vector.load %arg8[%c0_10, %c17] : memref<4x18xf32, #tpu.memory_space<vmem>>, vector<4x1xf32>
    tpu.vector_store %arg8[%c0_10, %c17], %7 {strides = array<i32>} : memref<4x18xf32, #tpu.memory_space<vmem>>, vector<4x1xf32>,
    %9 = tpu.iota {dimensions = array<i32: 1>} : vector<4x18xi32>
    %c16_i32 = arith.constant 16 : i32
    %10 = arith.muli %arg1, %c16_i32 : i32
    %11 = vector.broadcast %10 : i32 to vector<4x18xi32>
    %12 = arith.addi %9, %11 : vector<4x18xi32>
    %c1_i32 = arith.constant 1 : i32
    %13 = vector.broadcast %c1_i32 : i32 to vector<4x18xi32>
    %14 = arith.subi %12, %13 : vector<4x18xi32>
    %c0_i32 = arith.constant 0 : i32
    %15 = vector.broadcast %c0_i32 : i32 to vector<4x18xi32>
    %16 = arith.cmpi sge, %14, %15 : vector<4x18xi32>
    %c16_i32_11 = arith.constant 16 : i32
    %17 = vector.broadcast %c16_i32_11 : i32 to vector<4x18xi32>
    %18 = arith.cmpi slt, %14, %17 : vector<4x18xi32>
    %19 = arith.andi %16, %18 : vector<4x18xi1>
    %c0_12 = arith.constant 0 : index
    %c0_13 = arith.constant 0 : index
    %20 = vector.load %arg8[%c0_12, %c0_13] : memref<4x18xf32, #tpu.memory_space<vmem>>, vector<4x18xf32>
    %c0_i32_14 = arith.constant 0 : i32
    %21 = arith.sitofp %c0_i32_14 : i32 to f32
    %22 = vector.broadcast %21 : f32 to vector<4x18xf32>
    %23 = arith.select %19, %20, %22 : vector<4x18xi1>, vector<4x18xf32>
    %c0_15 = arith.constant 0 : index
    %c0_16 = arith.constant 0 : index
    %24 = vector.load %arg6[%c0_15, %c0_16] : memref<8x1xf32, #tpu.memory_space<vmem>>, vector<8x1xf32>
    %25 = vector.shape_cast %24 : vector<8x1xf32> to vector<8x1xf32>
    %26 = vector.broadcast %25 : vector<8x1xf32> to vector<8x16xf32>
    %c0_17 = arith.constant 0 : index
    %c0_18 = arith.constant 0 : index
    %c0_19 = arith.constant 0 : index
    %27 = vector.load %arg5[%c0_17, %c0_18, %c0_19] : memref<3x8x4xf32, #tpu.memory_space<vmem>>, vector<1x8x4xf32>
    %28 = vector.shape_cast %27 : vector<1x8x4xf32> to vector<8x4xf32>
    %29 = vector.extract_strided_slice %23 {offsets = [0, 0], sizes = [4, 16], strides = [1, 1]} : vector<4x18xf32> to vector<4x16xf32>
    %cst = arith.constant dense<0.000000e+00> : vector<8x16xf32>
    %30 = tpu.matmul %28, %29, %cst {dimension_numbers = #tpu.dot_dimension_numbers<[1], [0], [0], [1], [0, 0, 1, 1], [], []>} : vector<8x4xf32>, vector<4x16xf32>, vector<8x16xf32> -> vector<8x16xf32>
    %31 = arith.addf %26, %30 : vector<8x16xf32>
    %c1_20 = arith.constant 1 : index
    %c0_21 = arith.constant 0 : index
    %c0_22 = arith.constant 0 : index
    %32 = vector.load %arg5[%c1_20, %c0_21, %c0_22] : memref<3x8x4xf32, #tpu.memory_space<vmem>>, vector<1x8x4xf32>
    %33 = vector.shape_cast %32 : vector<1x8x4xf32> to vector<8x4xf32>
    %34 = vector.extract_strided_slice %23 {offsets = [0, 1], sizes = [4, 16], strides = [1, 1]} : vector<4x18xf32> to vector<4x16xf32>
    %cst_23 = arith.constant dense<0.000000e+00> : vector<8x16xf32>
    %35 = tpu.matmul %33, %34, %cst_23 {dimension_numbers = #tpu.dot_dimension_numbers<[1], [0], [0], [1], [0, 0, 1, 1], [], []>} : vector<8x4xf32>, vector<4x16xf32>, vector<8x16xf32> -> vector<8x16xf32>
    %36 = arith.addf %31, %35 : vector<8x16xf32>
    %c2 = arith.constant 2 : index
    %c0_24 = arith.constant 0 : index
    %c0_25 = arith.constant 0 : index
    %37 = vector.load %arg5[%c2, %c0_24, %c0_25] : memref<3x8x4xf32, #tpu.memory_space<vmem>>, vector<1x8x4xf32>
    %38 = vector.shape_cast %37 : vector<1x8x4xf32> to vector<8x4xf32>
    %39 = vector.extract_strided_slice %23 {offsets = [0, 2], sizes = [4, 16], strides = [1, 1]} : vector<4x18xf32> to vector<4x16xf32>
    %cst_26 = arith.constant dense<0.000000e+00> : vector<8x16xf32>
    %40 = tpu.matmul %38, %39, %cst_26 {dimension_numbers = #tpu.dot_dimension_numbers<[1], [0], [0], [1], [0, 0, 1, 1], [], []>} : vector<8x4xf32>, vector<4x16xf32>, vector<8x16xf32> -> vector<8x16xf32>
    %41 = arith.addf %36, %40 : vector<8x16xf32>
    %c0_27 = arith.constant 0 : index
    %c0_28 = arith.constant 0 : index
    %c0_29 = arith.constant 0 : index
    %42 = vector.load %arg7[%c0_27, %c0_28, %c0_29] : memref<1x8x16xf32, #tpu.memory_space<vmem>>, vector<1x8x16xf32>
    %43 = vector.shape_cast %42 : vector<1x8x16xf32> to vector<8x16xf32>
    %44 = vector.shape_cast %41 : vector<8x16xf32> to vector<1x8x16xf32>
    tpu.vector_store %arg7[%c0_27, %c0_28, %c0_29], %44 {strides = array<i32>} : memref<1x8x16xf32, #tpu.memory_space<vmem>>, vector<1x8x16xf32>,
    return
  }
  func.func @transform_0(%arg0: i32, %arg1: i32) -> (i32, i32, i32) {
    %c1_i32 = arith.constant 1 : i32
    %0 = arith.muli %arg1, %c1_i32 : i32
    %c1_i32_0 = arith.constant 1 : i32
    %1 = arith.subi %0, %c1_i32_0 : i32
    %c0_i32 = arith.constant 0 : i32
    %2 = arith.maxsi %1, %c0_i32 : i32
    %c0_i32_1 = arith.constant 0 : i32
    %c0_i32_2 = arith.constant 0 : i32
    return %arg0, %c0_i32_1, %2 : i32, i32, i32
  }
  func.func @transform_1(%arg0: i32, %arg1: i32) -> (i32, i32, i32) {
    %c0_i32 = arith.constant 0 : i32
    %c0_i32_0 = arith.constant 0 : i32
    return %arg0, %c0_i32, %arg1 : i32, i32, i32
  }
  func.func @transform_2(%arg0: i32, %arg1: i32) -> (i32, i32, i32) {
    %c1_i32 = arith.constant 1 : i32
    %0 = arith.addi %arg1, %c1_i32 : i32
    %c1_i32_0 = arith.constant 1 : i32
    %1 = arith.muli %0, %c1_i32_0 : i32
    %c0_i32 = arith.constant 0 : i32
    %2 = arith.minsi %1, %c0_i32 : i32
    %c0_i32_1 = arith.constant 0 : i32
    %c0_i32_2 = arith.constant 0 : i32
    return %arg0, %c0_i32_1, %2 : i32, i32, i32
  }
  func.func @transform_3(%arg0: i32, %arg1: i32) -> (i32, i32, i32) {
    %c0_i32 = arith.constant 0 : i32
    %c0_i32_0 = arith.constant 0 : i32
    %c0_i32_1 = arith.constant 0 : i32
    %c0_i32_2 = arith.constant 0 : i32
    return %c0_i32, %c0_i32_0, %c0_i32_1 : i32, i32, i32
  }
  func.func @transform_4(%arg0: i32, %arg1: i32) -> (i32, i32) {
    %c0_i32 = arith.constant 0 : i32
    %c0_i32_0 = arith.constant 0 : i32
    %c0_i32_1 = arith.constant 0 : i32
    return %c0_i32, %c0_i32_0 : i32, i32
  }
  func.func @transform_5(%arg0: i32, %arg1: i32) -> (i32, i32, i32) {
    %c0_i32 = arith.constant 0 : i32
    %c0_i32_0 = arith.constant 0 : i32
    return %arg0, %c0_i32, %arg1 : i32, i32, i32
  }
}

</mosaic_0001>

<llo_original>
// kernel: tpu_custom_call.1
$region0: #{tpu_custom_call.1}
  #allocation0 [shape = 'u32[]', space=smem, size = 0x4, offset = 0x4, fixed_abs, tag = 'smem constant byte address 0x4 - core index']
  #allocation1 [shape = 'u32[72,128]{1,0:T(1,128)}', space=vmem, size = 0x9000, scoped, tag = 'internal scratch']
  #allocation2 [shape = 'f32[4,18]{1,0:T(4,128)}', space=vmem, size = 0x800, scoped, tag = 'scratch operand']
  %s0 = inlined_call_operand.vmem [shape: f32[2,4,16], index: 0, kind: input, shape index: {}]
  %s1 = inlined_call_operand.vmem [shape: f32[2,4,16], index: 1, kind: input, shape index: {}]
  %s2 = inlined_call_operand.vmem [shape: f32[2,4,16], index: 2, kind: input, shape index: {}]
  %s3 = inlined_call_operand.vmem [shape: f32[3,8,4], index: 3, kind: input, shape index: {}]
  %s4 = inlined_call_operand.vmem [shape: f32[8,1], index: 4, kind: input, shape index: {}]
  %s5 = inlined_call_operand.hbm [shape: f32[2,8,16], index: 5, kind: output, shape index: {}]
  %s6 = sld [smem:[#allocation0]]
  $region53: #{tpu_custom_call.1} parent=0
    _
  %s8 = ssub.s32 1, %s6
  %s9 = scalar_select 0, %s8, %s6
  $region1: #{tpu_custom_call.1} parent=0
    #allocation3 [shape = 'u8[8192]{0}', space=vmem, size = 0x2000, scoped, tag = 'output window, operand 0']
    #allocation4 [shape = 's32[2]{0}', space=sflag, size = 0x8, scoped, tag = 'scoped memory for tpu_custom_call.1']
    %10 = vsyncpa [#allocation4], 0
    %s11 = scalar_lea.sflag [#allocation4], 1
    %12 = vsyncpa %s11, 0
    loop: start=0, step=1, limit=4
    $region2: #{tpu_custom_call.1} parent=1 // loop_pre_header
      _
    $region3: #{tpu_custom_call.1} parent=1 // loop_header
      %s14 = sphi 0, %s18
      %p15 = scmp.ge.s32.totalorder %s14, 4
      %s21 = sphi 0, %s33
      %s22 = sphi 0, %s29
      %s23 = sphi 0, %s21
      %s24 = sphi 0, %s22
      %s25 = sphi 0, %s23
      %s26 = sphi 0, %s24
      %s44 = sphi 0, %s46
      %s47 = sphi 0, %s44
      %s48 = sphi 0, %s47
      %s64 = sphi 0, %s48
      %s72 = sphi 0, %s74
      %s75 = sphi 0, %s72
      %s76 = sphi 0, %s75
      %s92 = sphi 0, %s76
      %s106 = sphi 0, %s108
      %s109 = sphi 0, %s106
      %s110 = sphi 0, %s109
      %s126 = sphi 0, %s110
      %s130 = sphi 0, %s130
      %s132 = sphi 0, %s130
      %s133 = sphi 0, %s132
      %s147 = sphi 0, %s133
      %s151 = sphi 0, %s151
      %s153 = sphi 0, %s151
      %s154 = sphi 0, %s153
      %s168 = sphi 0, %s154
      %s176 = sphi 0, %s178
      %s179 = sphi 0, %s176
      %s180 = sphi 0, %s179
      %s196 = sphi 0, %s180
    $region4: #{tpu_custom_call.1} parent=1 // loop_header_branch
      %17 = sbr.rel (%p15) target = $region8
    $region5: #{tpu_custom_call.1} parent=1 // loop_body
      %s19 = ssub.s32 %s14, 1
      %s20 = ssub.s32 %s14, 2
      %s27 = sadd.s32 1, %s22
      %p28 = scmp.ge.s32.totalorder %s27, 1
      %s29 = scalar_select %p28, 0, %s27
      %s30 = sadd.s32 1, %s21
      %s31 = scalar_select %p28, %s30, %s21
      %p32 = scmp.ge.s32.totalorder %s31, 2
      %s33 = scalar_select %p32, 0, %s31
      %s34 = ssub.s32 %s22, 1
      %p35 = scmp.gt.s32.totalorder %s34, 0
      %s36 = scalar_select %p35, %s34, 0
      %s37 = ssub.s32 %s29, 1
      %p38 = scmp.gt.s32.totalorder %s37, 0
      %s39 = scalar_select %p38, %s37, 0
      %s40 = ssub.s32 %s21, %s33
      %s41 = ssub.s32 %s36, %s39
      %s42 = sor.u32 %s40, %s41
      %p43 = scmp.eq.s32.totalorder %s42, 0
      %s45 = sadd.s32 %s44, 1
      %s46 = scalar_select %p43, %s44, %s45
      %p49 = pneg %p43
      %p50 = scmp.eq.s32.totalorder %s14, 1
      %p51 = por %p49, %p50
      %p52 = scmp.ne.s32.totalorder %s44, %s47
      %p53 = scmp.eq.s32.totalorder %s14, 0
      %p54 = por %p52, %p53
      %p55 = scmp.ne.s32.totalorder %s44, %s47
      %p56 = scmp.eq.s32.totalorder %s19, 1
      %p57 = por %p55, %p56
      %p58 = scmp.ne.s32.totalorder %s47, %s48
      %p59 = scmp.eq.s32.totalorder %s19, 0
      %p60 = por %p58, %p59
      %p61 = scmp.ne.s32.totalorder %s47, %s48
      %p62 = scmp.eq.s32.totalorder %s20, 1
      %p63 = por %p61, %p62
      %p65 = scmp.ne.s32.totalorder %s48, %s64
      %p66 = scmp.eq.s32.totalorder %s20, 0
      %p67 = por %p65, %p66
      %s68 = ssub.s32 %s21, %s33
      %s69 = ssub.s32 %s22, %s29
      %s70 = sor.u32 %s68, %s69
      %p71 = scmp.eq.s32.totalorder %s70, 0
      %s73 = sadd.s32 %s72, 1
      %s74 = scalar_select %p71, %s72, %s73
      %p77 = pneg %p71
      %p78 = scmp.eq.s32.totalorder %s14, 1
      %p79 = por %p77, %p78
      %p80 = scmp.ne.s32.totalorder %s72, %s75
      %p81 = scmp.eq.s32.totalorder %s14, 0
      %p82 = por %p80, %p81
      %p83 = scmp.ne.s32.totalorder %s72, %s75
      %p84 = scmp.eq.s32.totalorder %s19, 1
      %p85 = por %p83, %p84
      %p86 = scmp.ne.s32.totalorder %s75, %s76
      %p87 = scmp.eq.s32.totalorder %s19, 0
      %p88 = por %p86, %p87
      %p89 = scmp.ne.s32.totalorder %s75, %s76
      %p90 = scmp.eq.s32.totalorder %s20, 1
      %p91 = por %p89, %p90
      %p93 = scmp.ne.s32.totalorder %s76, %s92
      %p94 = scmp.eq.s32.totalorder %s20, 0
      %p95 = por %p93, %p94
      %s96 = sadd.s32 %s22, 1
      %p97 = scmp.lt.s32.totalorder %s96, 0
      %s98 = scalar_select %p97, %s96, 0
      %s99 = sadd.s32 %s29, 1
      %p100 = scmp.lt.s32.totalorder %s99, 0
      %s101 = scalar_select %p100, %s99, 0
      %s102 = ssub.s32 %s21, %s33
      %s103 = ssub.s32 %s98, %s101
      %s104 = sor.u32 %s102, %s103
      %p105 = scmp.eq.s32.totalorder %s104, 0
      %s107 = sadd.s32 %s106, 1
      %s108 = scalar_select %p105, %s106, %s107
      %p111 = pneg %p105
      %p112 = scmp.eq.s32.totalorder %s14, 1
      %p113 = por %p111, %p112
      %p114 = scmp.ne.s32.totalorder %s106, %s109
      %p115 = scmp.eq.s32.totalorder %s14, 0
      %p116 = por %p114, %p115
      %p117 = scmp.ne.s32.totalorder %s106, %s109
      %p118 = scmp.eq.s32.totalorder %s19, 1
      %p119 = por %p117, %p118
      %p120 = scmp.ne.s32.totalorder %s109, %s110
      %p121 = scmp.eq.s32.totalorder %s19, 0
      %p122 = por %p120, %p121
      %p123 = scmp.ne.s32.totalorder %s109, %s110
      %p124 = scmp.eq.s32.totalorder %s20, 1
      %p125 = por %p123, %p124
      %p127 = scmp.ne.s32.totalorder %s110, %s126
      %p128 = scmp.eq.s32.totalorder %s20, 0
      %p129 = por %p127, %p128
      %s131 = sadd.s32 %s130, 1
      %p134 = scmp.eq.s32.totalorder %s14, 1
      %p135 = scmp.ne.s32.totalorder %s130, %s132
      %p136 = scmp.eq.s32.totalorder %s14, 0
      %p137 = por %p135, %p136
      %p138 = scmp.ne.s32.totalorder %s130, %s132
      %p139 = scmp.eq.s32.totalorder %s19, 1
      %p140 = por %p138, %p139
      %p141 = scmp.ne.s32.totalorder %s132, %s133
      %p142 = scmp.eq.s32.totalorder %s19, 0
      %p143 = por %p141, %p142
      %p144 = scmp.ne.s32.totalorder %s132, %s133
      %p145 = scmp.eq.s32.totalorder %s20, 1
      %p146 = por %p144, %p145
      %p148 = scmp.ne.s32.totalorder %s133, %s147
      %p149 = scmp.eq.s32.totalorder %s20, 0
      %p150 = por %p148, %p149
      %s152 = sadd.s32 %s151, 1
      %p155 = scmp.eq.s32.totalorder %s14, 1
      %p156 = scmp.ne.s32.totalorder %s151, %s153
      %p157 = scmp.eq.s32.totalorder %s14, 0
      %p158 = por %p156, %p157
      %p159 = scmp.ne.s32.totalorder %s151, %s153
      %p160 = scmp.eq.s32.totalorder %s19, 1
      %p161 = por %p159, %p160
      %p162 = scmp.ne.s32.totalorder %s153, %s154
      %p163 = scmp.eq.s32.totalorder %s19, 0
      %p164 = por %p162, %p163
      %p165 = scmp.ne.s32.totalorder %s153, %s154
      %p166 = scmp.eq.s32.totalorder %s20, 1
      %p167 = por %p165, %p166
      %p169 = scmp.ne.s32.totalorder %s154, %s168
      %p170 = scmp.eq.s32.totalorder %s20, 0
      %p171 = por %p169, %p170
      %s172 = ssub.s32 %s21, %s33
      %s173 = ssub.s32 %s22, %s29
      %s174 = sor.u32 %s172, %s173
      %p175 = scmp.eq.s32.totalorder %s174, 0
      %s177 = sadd.s32 %s176, 1
      %s178 = scalar_select %p175, %s176, %s177
      %p181 = pneg %p175
      %p182 = scmp.eq.s32.totalorder %s14, 1
      %p183 = por %p181, %p182
      %p184 = scmp.ne.s32.totalorder %s176, %s179
      %p185 = scmp.eq.s32.totalorder %s14, 0
      %p186 = por %p184, %p185
      %p187 = scmp.ne.s32.totalorder %s176, %s179
      %p188 = scmp.eq.s32.totalorder %s19, 1
      %p189 = por %p187, %p188
      %p190 = scmp.ne.s32.totalorder %s179, %s180
      %p191 = scmp.eq.s32.totalorder %s19, 0
      %p192 = por %p190, %p191
      %p193 = scmp.ne.s32.totalorder %s179, %s180
      %p194 = scmp.eq.s32.totalorder %s20, 1
      %p195 = por %p193, %p194
      %p197 = scmp.ne.s32.totalorder %s180, %s196
      %p198 = scmp.eq.s32.totalorder %s20, 0
      %p199 = por %p197, %p198
      %p200 = scmp.le.s32.totalorder 1, %s14
      %p201 = scmp.lt.s32.totalorder %s14, 3
      %p202 = pnand %p200, %p201
      %p203 = pneg %p202
      // Predicated region
      $region9: #{tpu_custom_call.1} parent=5 // pred_check
        _
      $region10: #{tpu_custom_call.1} parent=5 // pred_check_branch
        %205 = sbr.rel (%p202) target = $region12
      $region11: #{tpu_custom_call.1} parent=5 // pred_region
        %s206 = ssub.s32 %s14, 1
        // Predicated region
        $region13: #{tpu_custom_call.1} parent=11 // pred_check
          %p207 = pneg %p143
        $region14: #{tpu_custom_call.1} parent=11 // pred_check_branch
          %209 = sbr.rel (%p207) target = $region16
        $region15: #{tpu_custom_call.1} parent=11 // pred_region
          _
        $region16: #{tpu_custom_call.1} parent=11 // pred_fallthru
          _
        // Predicated region
        $region17: #{tpu_custom_call.1} parent=11 // pred_check
          %p210 = pneg %p164
        $region18: #{tpu_custom_call.1} parent=11 // pred_check_branch
          %212 = sbr.rel (%p210) target = $region20
        $region19: #{tpu_custom_call.1} parent=11 // pred_region
          _
        $region20: #{tpu_custom_call.1} parent=11 // pred_fallthru
          _
      $region12: #{tpu_custom_call.1} parent=5 // pred_fallthru
        _
      %p213 = scmp.lt.s32.totalorder %s14, 2
      // Predicated region
      $region21: #{tpu_custom_call.1} parent=5 // pred_check
        %p214 = pneg %p213
      $region22: #{tpu_custom_call.1} parent=5 // pred_check_branch
        %216 = sbr.rel (%p214) target = $region24
      $region23: #{tpu_custom_call.1} parent=5 // pred_region
        // Predicated region
        $region25: #{tpu_custom_call.1} parent=23 // pred_check
          %p217 = pneg %p54
        $region26: #{tpu_custom_call.1} parent=23 // pred_check_branch
          %219 = sbr.rel (%p217) target = $region28
        $region27: #{tpu_custom_call.1} parent=23 // pred_region
          %s220 = ssub.s32 %s22, 1
          %p221 = scmp.gt.s32.totalorder %s220, 0
          %s222 = scalar_select %p221, %s220, 0
          %p223 = scmp.lt.s32.totalorder %s21, 1
          %s224 = scalar_select %p223, %s21, 1
          %p225 = scmp.lt.s32.totalorder %s222, 0
          %s226 = scalar_select %p225, %s222, 0
          %s227 = sadd.s32 %s226, %s224
          %s228 = smul.addr %s227, 4
          %s229 = scalar_lea.vmem %s0, %s228
          %s230 = ssub.s32 %s22, 1
          %p231 = scmp.gt.s32.totalorder %s230, 0
          %s232 = scalar_select %p231, %s230, 0
        $region28: #{tpu_custom_call.1} parent=23 // pred_fallthru
          _
        // Predicated region
        $region29: #{tpu_custom_call.1} parent=23 // pred_check
          %p233 = pneg %p82
        $region30: #{tpu_custom_call.1} parent=23 // pred_check_branch
          %235 = sbr.rel (%p233) target = $region32
        $region31: #{tpu_custom_call.1} parent=23 // pred_region
          %p236 = scmp.lt.s32.totalorder %s21, 1
          %s237 = scalar_select %p236, %s21, 1
          %p238 = scmp.lt.s32.totalorder %s22, 0
          %s239 = scalar_select %p238, %s22, 0
          %s240 = sadd.s32 %s239, %s237
          %s241 = smul.addr %s240, 4
          %s242 = scalar_lea.vmem %s1, %s241
        $region32: #{tpu_custom_call.1} parent=23 // pred_fallthru
          _
        // Predicated region
        $region33: #{tpu_custom_call.1} parent=23 // pred_check
          %p243 = pneg %p116
        $region34: #{tpu_custom_call.1} parent=23 // pred_check_branch
          %245 = sbr.rel (%p243) target = $region36
        $region35: #{tpu_custom_call.1} parent=23 // pred_region
          %s246 = sadd.s32 %s22, 1
          %p247 = scmp.lt.s32.totalorder %s246, 0
          %s248 = scalar_select %p247, %s246, 0
          %p249 = scmp.lt.s32.totalorder %s21, 1
          %s250 = scalar_select %p249, %s21, 1
          %p251 = scmp.lt.s32.totalorder %s248, 0
          %s252 = scalar_select %p251, %s248, 0
          %s253 = sadd.s32 %s252, %s250
          %s254 = smul.addr %s253, 4
          %s255 = scalar_lea.vmem %s2, %s254
          %s256 = sadd.s32 %s22, 1
          %p257 = scmp.lt.s32.totalorder %s256, 0
          %s258 = scalar_select %p257, %s256, 0
        $region36: #{tpu_custom_call.1} parent=23 // pred_fallthru
          _
      $region24: #{tpu_custom_call.1} parent=5 // pred_fallthru
        _
      %p259 = scmp.le.s32.totalorder 1, %s14
      %p260 = scmp.lt.s32.totalorder %s14, 3
      %p261 = pnand %p259, %p260
      %p262 = pneg %p261
      // Predicated region
      $region37: #{tpu_custom_call.1} parent=5 // pred_check
        _
      $region38: #{tpu_custom_call.1} parent=5 // pred_check_branch
        %264 = sbr.rel (%p261) target = $region40
      $region39: #{tpu_custom_call.1} parent=5 // pred_region
        %s265 = ssub.s32 %s14, 1
        %s266 = ssub.s32 %s24, 1
        %p267 = scmp.gt.s32.totalorder %s266, 0
        %s268 = scalar_select %p267, %s266, 0
        %p269 = scmp.lt.s32.totalorder %s23, 1
        %s270 = scalar_select %p269, %s23, 1
        %p271 = scmp.lt.s32.totalorder %s268, 0
        %s272 = scalar_select %p271, %s268, 0
        %s273 = sadd.s32 %s272, %s270
        %s274 = smul.addr %s273, 4
        %s275 = scalar_lea.vmem %s0, %s274
        %p276 = pneg %p60
        %p277 = pneg %p57
        %p278 = scmp.lt.s32.totalorder %s23, 1
        %s279 = scalar_select %p278, %s23, 1
        %p280 = scmp.lt.s32.totalorder %s24, 0
        %s281 = scalar_select %p280, %s24, 0
        %s282 = sadd.s32 %s281, %s279
        %s283 = smul.addr %s282, 4
        %s284 = scalar_lea.vmem %s1, %s283
        %p285 = pneg %p88
        %p286 = pneg %p85
        %s287 = sadd.s32 %s24, 1
        %p288 = scmp.lt.s32.totalorder %s287, 0
        %s289 = scalar_select %p288, %s287, 0
        %p290 = scmp.lt.s32.totalorder %s23, 1
        %s291 = scalar_select %p290, %s23, 1
        %p292 = scmp.lt.s32.totalorder %s289, 0
        %s293 = scalar_select %p292, %s289, 0
        %s294 = sadd.s32 %s293, %s291
        %s295 = smul.addr %s294, 4
        %s296 = scalar_lea.vmem %s2, %s295
        %p297 = pneg %p122
        %p298 = pneg %p119
        %p299 = pneg %p143
        %p300 = pneg %p140
        %p301 = pneg %p164
        %p302 = pneg %p161
        %p303 = pneg %p192
        %p304 = pneg %p189
        %s305 = sand.u32 %s179, 1
        %s306 = scalar_lea.sflag [#allocation4], %s305
        %s307 = sand.u32 %s179, 1
        %s308 = smul.addr %s307, 8
        %s309 = scalar_lea.vmem [#allocation3], %s308
        %s310 = ssub.s32 %s24, 1
        %p311 = scmp.gt.s32.totalorder %s310, 0
        %s312 = scalar_select %p311, %s310, 0
        %p313 = scmp.lt.s32.totalorder %s23, 1
        %s314 = scalar_select %p313, %s23, 1
        %p315 = scmp.lt.s32.totalorder %s312, 0
        %s316 = scalar_select %p315, %s312, 0
        %s317 = sadd.s32 %s316, %s314
        %s318 = smul.addr %s317, 4
        %s319 = scalar_lea.vmem %s0, %s318
        %s320 = ssub.s32 %s24, 1
        %p321 = scmp.gt.s32.totalorder %s320, 0
        %s322 = scalar_select %p321, %s320, 0
        %p323 = scmp.lt.s32.totalorder %s23, 1
        %s324 = scalar_select %p323, %s23, 1
        %p325 = scmp.lt.s32.totalorder %s24, 0
        %s326 = scalar_select %p325, %s24, 0
        %s327 = sadd.s32 %s326, %s324
        %s328 = smul.addr %s327, 4
        %s329 = scalar_lea.vmem %s1, %s328
        %s330 = sadd.s32 %s24, 1
        %p331 = scmp.lt.s32.totalorder %s330, 0
        %s332 = scalar_select %p331, %s330, 0
        %p333 = scmp.lt.s32.totalorder %s23, 1
        %s334 = scalar_select %p333, %s23, 1
        %p335 = scmp.lt.s32.totalorder %s332, 0
        %s336 = scalar_select %p335, %s332, 0
        %s337 = sadd.s32 %s336, %s334
        %s338 = smul.addr %s337, 4
        %s339 = scalar_lea.vmem %s2, %s338
        %s340 = sadd.s32 %s24, 1
        %p341 = scmp.lt.s32.totalorder %s340, 0
        %s342 = scalar_select %p341, %s340, 0
        %v343 = vld [vmem:[%s319] sm:$0xf]
        %345 = vrot.lane.b32.xlu0 %v343, 113
        %v346 = vpop.permute.xlu0 %345
        %vm348 = vcmask 3072
        %349 = vst.msk [vmem:[#allocation2] sm:$0xf] %vm348, %v346
        %v350 = vld [vmem:[%s329] sm:$0xf]
        %352 = vrot.lane.b32.xlu0 %v350, 1
        %v353 = vpop.permute.xlu0 %352
        %vm355 = vcmask 134152
        %356 = vst.msk [vmem:[#allocation2] sm:$0xf] %vm355, %v353
        %v357 = vld [vmem:[%s339] sm:$0xf]
        %359 = vrot.lane.b32.xlu0 %v357, 17
        %v360 = vpop.permute.xlu0 %359
        %vm362 = vcmask 142472
        %363 = vst.msk [vmem:[#allocation2] sm:$0xf] %vm362, %v360
        %v364 = vlaneseq
        %v365 = vand.u32 %v364, 127
        %s366 = smul.u32 %s24, 16
        %v367 = vstv %s366
        %v368 = vadd.s32 %v365, %v367
        %v369 = vsub.s32 %v368, 1
        %vm370 = vcmp.ge.s32.totalorder %v369, 0
        %vm371 = vcmp.lt.s32.totalorder %v369, 16
        %vm372 = vmand %vm370, %vm371
        %v373 = vld [vmem:[#allocation2] sm:$0xf]
        %v374 = vsel %vm372, %v373, 0.0
        %v375 = vld [vmem:[%s4] sm:$0xff]
        %377 = vset.pattern.permute.xlu0 0
        %378 = vperm.xlu0 %377, %v375
        %v379 = vpop.permute.xlu0 %378
        %v381 = vld [vmem:[%s3] sm:$0xff]
        %vm382 = vcmask 31744
        %v384 = vsel %vm382, %v381, 0
        %vm386 = vcmask 1043456
        %v388 = vsel %vm386, %v374, 0
        %390 = vmatpush.msra.mxu0 0.0
        %391 = vmatpush.msra.mxu0 0.0
        %392 = vmatpush.msra.mxu0 0.0
        %393 = vmatpush.msra.mxu0 0.0
        %394 = vmatpush.msra.mxu0 0.0
        %395 = vmatpush.msra.mxu0 0.0
        %396 = vmatpush.msra.mxu0 0.0
        %397 = vmatpush.msra.mxu0 0.0
        %398 = vmatpush.msra.mxu0 0.0
        %399 = vmatpush.msra.mxu0 0.0
        %400 = vmatpush.msra.mxu0 0.0
        %401 = vmatpush.msra.mxu0 0.0
        %402 = vmatpush.msra.mxu0 0.0
        %403 = vmatpush.msra.mxu0 0.0
        %404 = vmatpush.msra.mxu0 0.0
        %405 = vmatpush.msra.mxu0 %v388
        %406 = vmatmul.f32.gmra.mxu0 %v384
        %v407 = vpop.f32.mrf.mxu0
        %v408 = vadd.f32 0.0, %v407
        %409 = vdwg.mxu0
        %v410 = vadd.f32 %v379, %v408
        %s411 = scalar_lea.vmem %s3, 8
        %v412 = vld [vmem:[%s411] sm:$0xff]
        %413 = vrot.lane.b32.xlu0 %v374, 127
        %v414 = vpop.permute.xlu0 %413
        %v416 = vsel %vm382, %v412, 0
        %v418 = vsel %vm386, %v414, 0
        %420 = vmatpush.msra.mxu0 0.0
        %421 = vmatpush.msra.mxu0 0.0
        %422 = vmatpush.msra.mxu0 0.0
        %423 = vmatpush.msra.mxu0 0.0
        %424 = vmatpush.msra.mxu0 0.0
        %425 = vmatpush.msra.mxu0 0.0
        %426 = vmatpush.msra.mxu0 0.0
        %427 = vmatpush.msra.mxu0 0.0
        %428 = vmatpush.msra.mxu0 0.0
        %429 = vmatpush.msra.mxu0 0.0
        %430 = vmatpush.msra.mxu0 0.0
        %431 = vmatpush.msra.mxu0 0.0
        %432 = vmatpush.msra.mxu0 0.0
        %433 = vmatpush.msra.mxu0 0.0
        %434 = vmatpush.msra.mxu0 0.0
        %435 = vmatpush.msra.mxu0 %v418
        %436 = vmatmul.f32.gmra.mxu0 %v416
        %v437 = vpop.f32.mrf.mxu0
        %v438 = vadd.f32 0.0, %v437
        %439 = vdwg.mxu0
        %v440 = vadd.f32 %v410, %v438
        %s441 = scalar_lea.vmem %s3, 16
        %v442 = vld [vmem:[%s441] sm:$0xff]
        %443 = vrot.lane.b32.xlu0 %v374, 126
        %v444 = vpop.permute.xlu0 %443
        %v446 = vsel %vm382, %v442, 0
        %v448 = vsel %vm386, %v444, 0
        %450 = vmatpush.msra.mxu0 0.0
        %451 = vmatpush.msra.mxu0 0.0
        %452 = vmatpush.msra.mxu0 0.0
        %453 = vmatpush.msra.mxu0 0.0
        %454 = vmatpush.msra.mxu0 0.0
        %455 = vmatpush.msra.mxu0 0.0
        %456 = vmatpush.msra.mxu0 0.0
        %457 = vmatpush.msra.mxu0 0.0
        %458 = vmatpush.msra.mxu0 0.0
        %459 = vmatpush.msra.mxu0 0.0
        %460 = vmatpush.msra.mxu0 0.0
        %461 = vmatpush.msra.mxu0 0.0
        %462 = vmatpush.msra.mxu0 0.0
        %463 = vmatpush.msra.mxu0 0.0
        %464 = vmatpush.msra.mxu0 0.0
        %465 = vmatpush.msra.mxu0 %v448
        %466 = vmatmul.f32.gmra.mxu0 %v446
        %v467 = vpop.f32.mrf.mxu0
        %v468 = vadd.f32 0.0, %v467
        %469 = vdwg.mxu0
        %v470 = vadd.f32 %v440, %v468
        %vm471 = vcmask 130048
        %472 = vst.msk [vmem:[%s309] sm:$0xff] %vm471, %v470
        %s473 = sand.u32 %s179, 1
        %s474 = scalar_lea.sflag [#allocation4], %s473
        %s475 = sand.u32 %s179, 1
        %s476 = smul.addr %s475, 8
        %s477 = scalar_lea.vmem [#allocation3], %s476
        // Predicated region
        $region41: #{tpu_custom_call.1} parent=39 // pred_check
          %p478 = pneg %p189
        $region42: #{tpu_custom_call.1} parent=39 // pred_check_branch
          %480 = sbr.rel (%p478) target = $region44
        $region43: #{tpu_custom_call.1} parent=39 // pred_region
          %482 = vsyncadd %s474, 0
          %s483 = sadd.s32 %s24, %s23
          %s484 = smul.addr %s483, 8
          %s485 = scalar_lea.hbm %s5, %s484
          %s487 = sshll.u32 %s477, 4
          %s488 = int_to_ptr.vmem [resolvable:$true] %s487
          %s489 = sshll.u32 %s485, 4
          %s490 = int_to_ptr.hbm [resolvable:$true] %s489
          %492 = dma.vmem_to_hbm [thread:$0]  %s488, 128, %s490, %s474
        $region44: #{tpu_custom_call.1} parent=39 // pred_fallthru
          _
      $region40: #{tpu_custom_call.1} parent=5 // pred_fallthru
        _
      %p493 = scmp.le.s32.totalorder 2, %s14
      // Predicated region
      $region45: #{tpu_custom_call.1} parent=5 // pred_check
        %p494 = pneg %p493
      $region46: #{tpu_custom_call.1} parent=5 // pred_check_branch
        %496 = sbr.rel (%p494) target = $region48
      $region47: #{tpu_custom_call.1} parent=5 // pred_region
        %s497 = ssub.s32 %s14, 2
        // Predicated region
        $region49: #{tpu_custom_call.1} parent=47 // pred_check
          %p498 = pneg %p195
        $region50: #{tpu_custom_call.1} parent=47 // pred_check_branch
          %500 = sbr.rel (%p498) target = $region52
        $region51: #{tpu_custom_call.1} parent=47 // pred_region
          %s501 = sand.u32 %s180, 1
          %s502 = scalar_lea.sflag [#allocation4], %s501
          %s503 = sand.u32 %s180, 1
          %s504 = smul.addr %s503, 8
          %s505 = scalar_lea.vmem [#allocation3], %s504
          %507 = dma.done %s502, 128
        $region52: #{tpu_custom_call.1} parent=47 // pred_fallthru
          _
      $region48: #{tpu_custom_call.1} parent=5 // pred_fallthru
        _
    $region6: #{tpu_custom_call.1} parent=1 // loop_footer
      %s18 = sadd.s32 1, %s14
    $region7: #{tpu_custom_call.1} parent=1 // loop_footer_branch
      %13 = sbr.rel target = $region3
    $region8: #{tpu_custom_call.1} parent=1 // loop_exit
      _
    %508 = vsyncpa [#allocation4], 1
    %s509 = scalar_lea.sflag [#allocation4], 1
    %510 = vsyncpa %s509, 1

</llo_original>
